<compile_context>
chip_gen: v6e
topology: v6e:2x2x1
jax: 0.10.0
libtpu: 0.0.40
codegen_flags: <defaults>
</compile_context>

<pallas_src>
import math

import jax
import jax.numpy as jnp
from jax.experimental import pallas as pl
from jax.experimental.pallas import tpu as pltpu

_INV_SQRT2 = 0.7071067811865476


def _round_up(x: int, m: int) -> int:
    return ((x + m - 1) // m) * m


def _gelu_exact(x):
    # PyTorch F.gelu default is the exact (erf-based) GELU.  Kept in f32.
    return 0.5 * x * (1.0 + jax.lax.erf(x * _INV_SQRT2))


def _mlp_kernel(x_ref, w1_ref, b1_ref, w2_ref, b2_ref, w3_ref, b3_ref, o_ref):
    cdt = w1_ref.dtype  # matmul compute dtype for the hidden layers (bf16 default)

    x = x_ref[...]  # already in compute dtype; K already sublane-padded in the wrapper
    h = jnp.dot(x, w1_ref[...], preferred_element_type=jnp.float32) + b1_ref[...]
    h = _gelu_exact(h)  # f32 elementwise

    h = jnp.dot(h.astype(cdt), w2_ref[...], preferred_element_type=jnp.float32) + b2_ref[...]
    h = _gelu_exact(h)  # f32 elementwise

    # Output head in f32 (w3/b3 stored in f32) -> o_ref is full-precision Q-values.
    out = jnp.dot(h, w3_ref[...], preferred_element_type=jnp.float32) + b3_ref[...]
    o_ref[...] = out.astype(o_ref.dtype)


def prepare_params(params, *, compute_dtype=jnp.bfloat16):
    """One-time weight prep: cast hidden-layer weights to compute dtype, pad the first
    contraction dim to a sublane multiple, keep the output head (w3/b3) in f32."""
    n, H = params["w1"].shape
    sub = 16 if compute_dtype == jnp.bfloat16 else 8
    Kp = _round_up(n, sub)

    w1 = jnp.zeros((Kp, H), compute_dtype).at[:n, :].set(params["w1"].astype(compute_dtype))
    w2 = params["w2"].astype(compute_dtype)
    w3 = params["w3"].astype(jnp.float32)                      # (H, n), f32 head
    b1 = params["b1"].astype(jnp.float32)                      # (1, H)
    b2 = params["b2"].astype(jnp.float32)                      # (1, H)
    b3 = params["b3"].astype(jnp.float32)                      # (1, n)

    return {
        "w1": w1, "b1": b1, "w2": w2, "b2": b2, "w3": w3, "b3": b3,
        "n": n, "H": H, "Kp": Kp, "raw": params,
    }


def bitflipping_dqn_forward(x, prep, *, batch_tile=1024, force_kernel=False):
    """x: (B, n) float32.  prep: output of prepare_params."""
    B, n = x.shape
    assert n == prep["n"], (n, prep["n"])

    # Small-batch fast path: launch + per-step overhead would dominate the kernel.
    if not force_kernel and B < 64:
        return reference_forward(x.astype(jnp.float32), prep["raw"])

    H = prep["H"]
    Kp = prep["Kp"]
    cdt = prep["w1"].dtype

    # Batch tiling: sublane-aligned tiles of up to `batch_tile` rows, weights resident.
    B8 = _round_up(B, 8)
    TB = min(batch_tile, B8)
    if B8 >= 1024:
        # Ensure >= 2 tiles once each half still amortizes the grid-step cost (v7x: 2 TCs).
        TB = min(TB, _round_up(pl.cdiv(B8, 2), 8))
    TB = _round_up(TB, 8)
    num_tiles = pl.cdiv(B8, TB)
    B_pad = num_tiles * TB

    # Cast (and, only if needed, pad) x once in the wrapper.
    if B_pad == B and Kp == n:
        x_prep = x.astype(cdt)
    else:
        x_prep = jnp.zeros((B_pad, Kp), cdt).at[:B, :n].set(x.astype(cdt))

    batch_blk = lambda i: (i, 0)
    fixed_blk = lambda i: (0, 0)

    out = pl.pallas_call(
        _mlp_kernel,
        out_shape=jax.ShapeDtypeStruct((B_pad, n), jnp.float32),
        grid=(num_tiles,),
        in_specs=[
            pl.BlockSpec((TB, Kp), batch_blk),   # x tile (compute dtype)
            pl.BlockSpec((Kp, H), fixed_blk),    # w1 (resident)
            pl.BlockSpec((1, H), fixed_blk),     # b1
            pl.BlockSpec((H, H), fixed_blk),     # w2
            pl.BlockSpec((1, H), fixed_blk),     # b2
            pl.BlockSpec((H, n), fixed_blk),     # w3 (f32 head, width n)
            pl.BlockSpec((1, n), fixed_blk),     # b3
        ],
        out_specs=pl.BlockSpec((TB, n), batch_blk),
        compiler_params=pltpu.CompilerParams(
            dimension_semantics=("parallel",),
        ),
    )(x_prep, prep["w1"], prep["b1"], prep["w2"], prep["b2"], prep["w3"], prep["b3"])

    return out[:B] if B_pad != B else out


def init_params(n: int, hidden: int = 128, seed: int = 0):
    """Deterministic init mimicking PyTorch nn.Linear default (uniform +/- 1/sqrt(fan_in)).
    Weights stored transposed: (in_features, out_features)."""
    key = jax.random.PRNGKey(seed)
    ks = jax.random.split(key, 6)

    def lin(kw, kb, fan_in, fan_out):
        bound = 1.0 / math.sqrt(fan_in)
        w = jax.random.uniform(kw, (fan_in, fan_out), jnp.float32, -bound, bound)
        b = jax.random.uniform(kb, (1, fan_out), jnp.float32, -bound, bound)
        return w, b

    w1, b1 = lin(ks[0], ks[1], n, hidden)
    w2, b2 = lin(ks[2], ks[3], hidden, hidden)
    w3, b3 = lin(ks[4], ks[5], hidden, n)
    return {"w1": w1, "b1": b1, "w2": w2, "b2": b2, "w3": w3, "b3": b3}


def reference_forward(x, params):
    h = _gelu_exact(x @ params["w1"] + params["b1"])
    h = _gelu_exact(h @ params["w2"] + params["b2"])
    return h @ params["w3"] + params["b3"]


if __name__ == "__main__":
    n = 16  # bit-sequence length (state/action dim)
    B = 8   # batch size
    params = init_params(n)

    key = jax.random.PRNGKey(0)
    # Bit-sequence states encoded as real 0/1 vectors.
    x = jax.random.bernoulli(key, 0.5, (B, n)).astype(jnp.float32)

    ref = reference_forward(x, params)

    # Exact f32 mode through the kernel (matches PyTorch exact-GELU f32 semantics).
    prep_f32 = prepare_params(params, compute_dtype=jnp.float32)
    out_f32 = jax.block_until_ready(
        bitflipping_dqn_forward(x, prep_f32, force_kernel=True))
    assert out_f32.shape == (B, n), out_f32.shape
    assert jnp.allclose(out_f32, ref, atol=1e-3, rtol=1e-3), "f32 mismatch vs reference"

    # Default bf16-matmul mode (f32 accumulation, f32 output head).
    prep_bf16 = prepare_params(params)
    out_bf16 = jax.block_until_ready(
        bitflipping_dqn_forward(x, prep_bf16, force_kernel=True))
    assert out_bf16.shape == (B, n), out_bf16.shape
    assert jnp.allclose(out_bf16, ref, atol=5e-2, rtol=5e-2), "bf16 mismatch vs reference"

    # Small-batch fast path (pure jnp) sanity check.
    out_fast = jax.block_until_ready(bitflipping_dqn_forward(x, prep_bf16))
    assert jnp.allclose(out_fast, ref, atol=1e-5, rtol=1e-5), "fast-path mismatch"

    print("KERNEL_OK")
</pallas_src>

<mosaic_0001>
module attributes {stable_mosaic.version = 11 : i64} {
  func.func @_mlp_kernel(%arg0: i32, %arg1: memref<8x16xf32, #tpu.memory_space<vmem>>, %arg2: memref<16x128xf32, #tpu.memory_space<vmem>>, %arg3: memref<1x128xf32, #tpu.memory_space<vmem>>, %arg4: memref<128x128xf32, #tpu.memory_space<vmem>>, %arg5: memref<1x128xf32, #tpu.memory_space<vmem>>, %arg6: memref<128x16xf32, #tpu.memory_space<vmem>>, %arg7: memref<1x16xf32, #tpu.memory_space<vmem>>, %arg8: memref<8x16xf32, #tpu.memory_space<vmem>>) attributes {dimension_semantics = [#tpu.dimension_semantics<parallel>], iteration_bounds = array<i64: 1>, scalar_prefetch = 0 : i64, scratch_operands = 0 : i64, tpu.core_type = #tpu.core_type<tc>, window_params = [{transform_indices = @transform_0, window_bounds = array<i64: 8, 16>}, {pipeline_mode = #tpu.pipeline_mode<synchronous>, transform_indices = @transform_1, window_bounds = array<i64: 16, 128>}, {pipeline_mode = #tpu.pipeline_mode<synchronous>, transform_indices = @transform_2, window_bounds = array<i64: 1, 128>}, {pipeline_mode = #tpu.pipeline_mode<synchronous>, transform_indices = @transform_3, window_bounds = array<i64: 128, 128>}, {pipeline_mode = #tpu.pipeline_mode<synchronous>, transform_indices = @transform_4, window_bounds = array<i64: 1, 128>}, {pipeline_mode = #tpu.pipeline_mode<synchronous>, transform_indices = @transform_5, window_bounds = array<i64: 128, 16>}, {pipeline_mode = #tpu.pipeline_mode<synchronous>, transform_indices = @transform_6, window_bounds = array<i64: 1, 16>}, {transform_indices = @transform_7, window_bounds = array<i64: 8, 16>}]} {
    %c0 = arith.constant 0 : index
    %c0_0 = arith.constant 0 : index
    %0 = vector.load %arg1[%c0, %c0_0] : memref<8x16xf32, #tpu.memory_space<vmem>>, vector<8x16xf32>
    %c0_1 = arith.constant 0 : index
    %c0_2 = arith.constant 0 : index
    %1 = vector.load %arg2[%c0_1, %c0_2] : memref<16x128xf32, #tpu.memory_space<vmem>>, vector<16x128xf32>
    %cst = arith.constant dense<0.000000e+00> : vector<8x128xf32>
    %2 = tpu.matmul %0, %1, %cst {dimension_numbers = #tpu.dot_dimension_numbers<[1], [0], [0], [1], [0, 0, 1, 1], [], []>} : vector<8x16xf32>, vector<16x128xf32>, vector<8x128xf32> -> vector<8x128xf32>
    %c0_3 = arith.constant 0 : index
    %c0_4 = arith.constant 0 : index
    %3 = vector.load %arg3[%c0_3, %c0_4] : memref<1x128xf32, #tpu.memory_space<vmem>>, vector<1x128xf32>
    %4 = vector.broadcast %3 : vector<1x128xf32> to vector<8x128xf32>
    %5 = arith.addf %2, %4 : vector<8x128xf32>
    %cst_5 = arith.constant 5.000000e-01 : f32
    %6 = vector.broadcast %cst_5 : f32 to vector<8x128xf32>
    %7 = arith.mulf %6, %5 : vector<8x128xf32>
    %cst_6 = arith.constant 0.707106769 : f32
    %8 = vector.broadcast %cst_6 : f32 to vector<8x128xf32>
    %9 = arith.mulf %5, %8 : vector<8x128xf32>
    %10 = math.erf %9 : vector<8x128xf32>
    %cst_7 = arith.constant 1.000000e+00 : f32
    %11 = vector.broadcast %cst_7 : f32 to vector<8x128xf32>
    %12 = arith.addf %11, %10 : vector<8x128xf32>
    %13 = arith.mulf %7, %12 : vector<8x128xf32>
    %c0_8 = arith.constant 0 : index
    %c0_9 = arith.constant 0 : index
    %14 = vector.load %arg4[%c0_8, %c0_9] : memref<128x128xf32, #tpu.memory_space<vmem>>, vector<128x128xf32>
    %cst_10 = arith.constant dense<0.000000e+00> : vector<8x128xf32>
    %15 = tpu.matmul %13, %14, %cst_10 {dimension_numbers = #tpu.dot_dimension_numbers<[1], [0], [0], [1], [0, 0, 1, 1], [], []>} : vector<8x128xf32>, vector<128x128xf32>, vector<8x128xf32> -> vector<8x128xf32>
    %c0_11 = arith.constant 0 : index
    %c0_12 = arith.constant 0 : index
    %16 = vector.load %arg5[%c0_11, %c0_12] : memref<1x128xf32, #tpu.memory_space<vmem>>, vector<1x128xf32>
    %17 = vector.broadcast %16 : vector<1x128xf32> to vector<8x128xf32>
    %18 = arith.addf %15, %17 : vector<8x128xf32>
    %cst_13 = arith.constant 5.000000e-01 : f32
    %19 = vector.broadcast %cst_13 : f32 to vector<8x128xf32>
    %20 = arith.mulf %19, %18 : vector<8x128xf32>
    %cst_14 = arith.constant 0.707106769 : f32
    %21 = vector.broadcast %cst_14 : f32 to vector<8x128xf32>
    %22 = arith.mulf %18, %21 : vector<8x128xf32>
    %23 = math.erf %22 : vector<8x128xf32>
    %cst_15 = arith.constant 1.000000e+00 : f32
    %24 = vector.broadcast %cst_15 : f32 to vector<8x128xf32>
    %25 = arith.addf %24, %23 : vector<8x128xf32>
    %26 = arith.mulf %20, %25 : vector<8x128xf32>
    %c0_16 = arith.constant 0 : index
    %c0_17 = arith.constant 0 : index
    %27 = vector.load %arg6[%c0_16, %c0_17] : memref<128x16xf32, #tpu.memory_space<vmem>>, vector<128x16xf32>
    %cst_18 = arith.constant dense<0.000000e+00> : vector<8x16xf32>
    %28 = tpu.matmul %26, %27, %cst_18 {dimension_numbers = #tpu.dot_dimension_numbers<[1], [0], [0], [1], [0, 0, 1, 1], [], []>} : vector<8x128xf32>, vector<128x16xf32>, vector<8x16xf32> -> vector<8x16xf32>
    %c0_19 = arith.constant 0 : index
    %c0_20 = arith.constant 0 : index
    %29 = vector.load %arg7[%c0_19, %c0_20] : memref<1x16xf32, #tpu.memory_space<vmem>>, vector<1x16xf32>
    %30 = vector.broadcast %29 : vector<1x16xf32> to vector<8x16xf32>
    %31 = arith.addf %28, %30 : vector<8x16xf32>
    %c0_21 = arith.constant 0 : index
    %c0_22 = arith.constant 0 : index
    %32 = vector.load %arg8[%c0_21, %c0_22] : memref<8x16xf32, #tpu.memory_space<vmem>>, vector<8x16xf32>
    tpu.vector_store %arg8[%c0_21, %c0_22], %31 {strides = array<i32>} : memref<8x16xf32, #tpu.memory_space<vmem>>, vector<8x16xf32>,
    return
  }
  func.func @transform_0(%arg0: i32) -> (i32, i32) {
    %c0_i32 = arith.constant 0 : i32
    %c0_i32_0 = arith.constant 0 : i32
    return %arg0, %c0_i32 : i32, i32
  }
  func.func @transform_1(%arg0: i32) -> (i32, i32) {
    %c0_i32 = arith.constant 0 : i32
    %c0_i32_0 = arith.constant 0 : i32
    %c0_i32_1 = arith.constant 0 : i32
    return %c0_i32, %c0_i32_0 : i32, i32
  }
  func.func @transform_2(%arg0: i32) -> (i32, i32) {
    %c0_i32 = arith.constant 0 : i32
    %c0_i32_0 = arith.constant 0 : i32
    %c0_i32_1 = arith.constant 0 : i32
    return %c0_i32, %c0_i32_0 : i32, i32
  }
  func.func @transform_3(%arg0: i32) -> (i32, i32) {
    %c0_i32 = arith.constant 0 : i32
    %c0_i32_0 = arith.constant 0 : i32
    %c0_i32_1 = arith.constant 0 : i32
    return %c0_i32, %c0_i32_0 : i32, i32
  }
  func.func @transform_4(%arg0: i32) -> (i32, i32) {
    %c0_i32 = arith.constant 0 : i32
    %c0_i32_0 = arith.constant 0 : i32
    %c0_i32_1 = arith.constant 0 : i32
    return %c0_i32, %c0_i32_0 : i32, i32
  }
  func.func @transform_5(%arg0: i32) -> (i32, i32) {
    %c0_i32 = arith.constant 0 : i32
    %c0_i32_0 = arith.constant 0 : i32
    %c0_i32_1 = arith.constant 0 : i32
    return %c0_i32, %c0_i32_0 : i32, i32
  }
  func.func @transform_6(%arg0: i32) -> (i32, i32) {
    %c0_i32 = arith.constant 0 : i32
    %c0_i32_0 = arith.constant 0 : i32
    %c0_i32_1 = arith.constant 0 : i32
    return %c0_i32, %c0_i32_0 : i32, i32
  }
  func.func @transform_7(%arg0: i32) -> (i32, i32) {
    %c0_i32 = arith.constant 0 : i32
    %c0_i32_0 = arith.constant 0 : i32
    return %arg0, %c0_i32 : i32, i32
  }
}

</mosaic_0001>

<llo_original>
// kernel: tpu_custom_call.1
$region0: #{tpu_custom_call.1}
  #allocation0 [shape = 'u32[]', space=smem, size = 0x4, offset = 0x4, fixed_abs, tag = 'smem constant byte address 0x4 - core index']
  #allocation1 [shape = 'u32[144,128]{1,0:T(1,128)}', space=vmem, size = 0x12000, scoped, tag = 'internal scratch']
  %s0 = inlined_call_operand.hbm [shape: f32[8,16], index: 0, kind: input, shape index: {}]
  %s1 = inlined_call_operand.vmem [shape: f32[16,128], index: 1, kind: input, shape index: {}]
  %s2 = inlined_call_operand.vmem [shape: f32[1,128], index: 2, kind: input, shape index: {}]
  %s3 = inlined_call_operand.vmem [shape: f32[128,128], index: 3, kind: input, shape index: {}]
  %s4 = inlined_call_operand.vmem [shape: f32[1,128], index: 4, kind: input, shape index: {}]
  %s5 = inlined_call_operand.vmem [shape: f32[128,16], index: 5, kind: input, shape index: {}]
  %s6 = inlined_call_operand.vmem [shape: f32[1,16], index: 6, kind: input, shape index: {}]
  %s7 = inlined_call_operand.hbm [shape: f32[8,16], index: 7, kind: output, shape index: {}]
  %s8 = sld [smem:[#allocation0]]
  $region42: #{tpu_custom_call.1} parent=0
    _
  %s10 = ssub.s32 1, %s8
  %s11 = scalar_select 0, %s10, %s8
  $region1: #{tpu_custom_call.1} parent=0
    #allocation2 [shape = 'u8[4096]{0}', space=vmem, size = 0x1000, scoped, tag = 'input window, operand 0, single buffered']
    #allocation3 [shape = 's32[1]{0}', space=sflag, size = 0x4, scoped, tag = 'scoped memory for tpu_custom_call.1']
    #allocation4 [shape = 's32[1]{0}', space=sflag, size = 0x4, scoped, tag = 'scoped memory for tpu_custom_call.1']
    #allocation5 [shape = 'u8[4096]{0}', space=vmem, size = 0x1000, scoped, tag = 'output window, operand 0, single buffered']
    %12 = vsyncpa [#allocation3], 0
    %13 = vsyncpa [#allocation4], 0
    // Predicated region
    $region2: #{tpu_custom_call.1} parent=1 // pred_check
      _
    $region3: #{tpu_custom_call.1} parent=1 // pred_check_branch
      %15 = sbr.rel (0) target = $region5
    $region4: #{tpu_custom_call.1} parent=1 // pred_region
      %s17 = ssub.s32 128, 128
      %18 = vsyncadd [#allocation3], %s17
      %s20 = sshll.u32 [#allocation2], 4
      %s21 = int_to_ptr.vmem [resolvable:$true] %s20
      %23 = dma.hbm_to_vmem [thread:$0]  %s0, 128, %s21, [#allocation3]
    $region5: #{tpu_custom_call.1} parent=1 // pred_fallthru
      _
    // Predicated region
    $region6: #{tpu_custom_call.1} parent=1 // pred_check
      _
    $region7: #{tpu_custom_call.1} parent=1 // pred_check_branch
      %25 = sbr.rel (0) target = $region9
    $region8: #{tpu_custom_call.1} parent=1 // pred_region
      _
    $region9: #{tpu_custom_call.1} parent=1 // pred_fallthru
      _
    // Predicated region
    $region10: #{tpu_custom_call.1} parent=1 // pred_check
      _
    $region11: #{tpu_custom_call.1} parent=1 // pred_check_branch
      %27 = sbr.rel (0) target = $region13
    $region12: #{tpu_custom_call.1} parent=1 // pred_region
      _
    $region13: #{tpu_custom_call.1} parent=1 // pred_fallthru
      _
    // Predicated region
    $region14: #{tpu_custom_call.1} parent=1 // pred_check
      _
    $region15: #{tpu_custom_call.1} parent=1 // pred_check_branch
      %29 = sbr.rel (0) target = $region17
    $region16: #{tpu_custom_call.1} parent=1 // pred_region
      _
    $region17: #{tpu_custom_call.1} parent=1 // pred_fallthru
      _
    // Predicated region
    $region18: #{tpu_custom_call.1} parent=1 // pred_check
      _
    $region19: #{tpu_custom_call.1} parent=1 // pred_check_branch
      %31 = sbr.rel (0) target = $region21
    $region20: #{tpu_custom_call.1} parent=1 // pred_region
      _
    $region21: #{tpu_custom_call.1} parent=1 // pred_fallthru
      _
    // Predicated region
    $region22: #{tpu_custom_call.1} parent=1 // pred_check
      _
    $region23: #{tpu_custom_call.1} parent=1 // pred_check_branch
      %33 = sbr.rel (0) target = $region25
    $region24: #{tpu_custom_call.1} parent=1 // pred_region
      _
    $region25: #{tpu_custom_call.1} parent=1 // pred_fallthru
      _
    // Predicated region
    $region26: #{tpu_custom_call.1} parent=1 // pred_check
      _
    $region27: #{tpu_custom_call.1} parent=1 // pred_check_branch
      %35 = sbr.rel (0) target = $region29
    $region28: #{tpu_custom_call.1} parent=1 // pred_region
      _
    $region29: #{tpu_custom_call.1} parent=1 // pred_fallthru
      _
    // Predicated region
    $region30: #{tpu_custom_call.1} parent=1 // pred_check
      _
    $region31: #{tpu_custom_call.1} parent=1 // pred_check_branch
      %37 = sbr.rel (0) target = $region33
    $region32: #{tpu_custom_call.1} parent=1 // pred_region
      %38 = dma.done [#allocation3], 128
    $region33: #{tpu_custom_call.1} parent=1 // pred_fallthru
      _
    %v39 = vld [vmem:[#allocation2] sm:$0xff]
    %v40 = vld [vmem:[%s1] sm:$0xff]
    %v41 = vld [vmem:[%s1 + $0x8] sm:$0xff]
    %v42 = vld [vmem:[%s2] sm:$0x1]
    %v44 = vlaneseq
    %v45 = vshrl.u32 %v44, 7
    %v46 = vsub.s32 0, %v45
    %v47 = vrot.slane %v42, %v46
    %vm49 = vcmask 130048
    %v51 = vsel %vm49, %v39, 0
    %53 = vmatprep.subr.mxu0 0.0
    %54 = vmatpush1.msra.mxu0 0.0
    %55 = vmatprep.subr.mxu0 0.0
    %56 = vmatpush1.msra.mxu0 0.0
    %57 = vmatprep.subr.mxu0 0.0
    %58 = vmatpush1.msra.mxu0 0.0
    %59 = vmatprep.subr.mxu0 0.0
    %60 = vmatpush1.msra.mxu0 0.0
    %61 = vmatprep.subr.mxu0 0.0
    %62 = vmatpush1.msra.mxu0 0.0
    %63 = vmatprep.subr.mxu0 0.0
    %64 = vmatpush1.msra.mxu0 0.0
    %65 = vmatprep.subr.mxu0 0.0
    %66 = vmatpush1.msra.mxu0 0.0
    %67 = vmatprep.subr.mxu0 0.0
    %68 = vmatpush1.msra.mxu0 0.0
    %69 = vmatprep.subr.mxu0 0.0
    %70 = vmatpush1.msra.mxu0 0.0
    %71 = vmatprep.subr.mxu0 0.0
    %72 = vmatpush1.msra.mxu0 0.0
    %73 = vmatprep.subr.mxu0 0.0
    %74 = vmatpush1.msra.mxu0 0.0
    %75 = vmatprep.subr.mxu0 0.0
    %76 = vmatpush1.msra.mxu0 0.0
    %77 = vmatprep.subr.mxu0 0.0
    %78 = vmatpush1.msra.mxu0 0.0
    %79 = vmatprep.subr.mxu0 0.0
    %80 = vmatpush1.msra.mxu0 0.0
    %81 = vmatprep.subr.mxu0 0.0
    %82 = vmatpush1.msra.mxu0 %v41
    %83 = vmatprep.subr.mxu0 0.0
    %84 = vmatpush1.msra.mxu0 %v40
    %85 = vmatprep.subr.mxu0 0.0
    %86 = vmatpush2.msra.mxu0 0.0
    %87 = vmatprep.subr.mxu0 0.0
    %88 = vmatpush2.msra.mxu0 0.0
    %89 = vmatprep.subr.mxu0 0.0
    %90 = vmatpush2.msra.mxu0 0.0
    %91 = vmatprep.subr.mxu0 0.0
    %92 = vmatpush2.msra.mxu0 0.0
    %93 = vmatprep.subr.mxu0 0.0
    %94 = vmatpush2.msra.mxu0 0.0
    %95 = vmatprep.subr.mxu0 0.0
    %96 = vmatpush2.msra.mxu0 0.0
    %97 = vmatprep.subr.mxu0 0.0
    %98 = vmatpush2.msra.mxu0 0.0
    %99 = vmatprep.subr.mxu0 0.0
    %100 = vmatpush2.msra.mxu0 0.0
    %101 = vmatprep.subr.mxu0 0.0
    %102 = vmatpush2.msra.mxu0 0.0
    %103 = vmatprep.subr.mxu0 0.0
    %104 = vmatpush2.msra.mxu0 0.0
    %105 = vmatprep.subr.mxu0 0.0
    %106 = vmatpush2.msra.mxu0 0.0
    %107 = vmatprep.subr.mxu0 0.0
    %108 = vmatpush2.msra.mxu0 0.0
    %109 = vmatprep.subr.mxu0 0.0
    %110 = vmatpush2.msra.mxu0 0.0
    %111 = vmatprep.subr.mxu0 0.0
    %112 = vmatpush2.msra.mxu0 0.0
    %113 = vmatprep.subr.mxu0 0.0
    %114 = vmatpush2.msra.mxu0 0.0
    %115 = vmatprep.subr.mxu0 0.0
    %116 = vmatpush2.msra.mxu0 0.0
    %117 = vmatprep.mubr.f32.mxu0 0.0
    %118 = vmatmul.mubr.f32.gmra.mxu0 %v51
    %v119 = vpop.f32.mrf.mxu0
    %v120 = vadd.f32 %v47, %v119
    %v121 = vpop.f32.mrf.mxu0
    %122 = vdwg.mxu0
    %v123 = vmul.f32 %v120, 0.5
    %v124 = vmul.f32 %v120, 0.70710677
    %v125 = verf.f32.pop %v124
    %v126 = vadd.f32 %v125, 1.0
    %v127 = vmul.f32 %v123, %v126
    %v128 = vld [vmem:[%s3] sm:$0xff]
    %v129 = vld [vmem:[%s3 + $0x8] sm:$0xff]
    %v130 = vld [vmem:[%s3 + $0x10] sm:$0xff]
    %v131 = vld [vmem:[%s3 + $0x18] sm:$0xff]
    %v132 = vld [vmem:[%s3 + $0x20] sm:$0xff]
    %v133 = vld [vmem:[%s3 + $0x28] sm:$0xff]
    %v134 = vld [vmem:[%s3 + $0x30] sm:$0xff]
    %v135 = vld [vmem:[%s3 + $0x38] sm:$0xff]
    %v136 = vld [vmem:[%s3 + $0x40] sm:$0xff]
    %v137 = vld [vmem:[%s3 + $0x48] sm:$0xff]
    %v138 = vld [vmem:[%s3 + $0x50] sm:$0xff]
    %v139 = vld [vmem:[%s3 + $0x58] sm:$0xff]
    %v140 = vld [vmem:[%s3 + $0x60] sm:$0xff]
    %v141 = vld [vmem:[%s3 + $0x68] sm:$0xff]
    %v142 = vld [vmem:[%s3 + $0x70] sm:$0xff]
    %v143 = vld [vmem:[%s3 + $0x78] sm:$0xff]
    %v144 = vld [vmem:[%s4] sm:$0x1]
    %v146 = vlaneseq
    %v147 = vshrl.u32 %v146, 7
    %v148 = vsub.s32 0, %v147
    %v149 = vrot.slane %v144, %v148
    %151 = vmatprep.subr.mxu0 0.0
    %152 = vmatpush1.msra.mxu0 %v143
    %153 = vmatprep.subr.mxu0 0.0
    %154 = vmatpush1.msra.mxu0 %v142
    %155 = vmatprep.subr.mxu0 0.0
    %156 = vmatpush1.msra.mxu0 %v141
    %157 = vmatprep.subr.mxu0 0.0
    %158 = vmatpush1.msra.mxu0 %v140
    %159 = vmatprep.subr.mxu0 0.0
    %160 = vmatpush1.msra.mxu0 %v139
    %161 = vmatprep.subr.mxu0 0.0
    %162 = vmatpush1.msra.mxu0 %v138
    %163 = vmatprep.subr.mxu0 0.0
    %164 = vmatpush1.msra.mxu0 %v137
    %165 = vmatprep.subr.mxu0 0.0
    %166 = vmatpush1.msra.mxu0 %v136
    %167 = vmatprep.subr.mxu0 0.0
    %168 = vmatpush1.msra.mxu0 %v135
    %169 = vmatprep.subr.mxu0 0.0
    %170 = vmatpush1.msra.mxu0 %v134
    %171 = vmatprep.subr.mxu0 0.0
    %172 = vmatpush1.msra.mxu0 %v133
    %173 = vmatprep.subr.mxu0 0.0
    %174 = vmatpush1.msra.mxu0 %v132
    %175 = vmatprep.subr.mxu0 0.0
    %176 = vmatpush1.msra.mxu0 %v131
    %177 = vmatprep.subr.mxu0 0.0
    %178 = vmatpush1.msra.mxu0 %v130
    %179 = vmatprep.subr.mxu0 0.0
    %180 = vmatpush1.msra.mxu0 %v129
    %181 = vmatprep.subr.mxu0 0.0
    %182 = vmatpush1.msra.mxu0 %v128
    %183 = vmatprep.subr.mxu0 0.0
    %184 = vmatpush2.msra.mxu0 0.0
    %185 = vmatprep.subr.mxu0 0.0
    %186 = vmatpush2.msra.mxu0 0.0
    %187 = vmatprep.subr.mxu0 0.0
    %188 = vmatpush2.msra.mxu0 0.0
    %189 = vmatprep.subr.mxu0 0.0
    %190 = vmatpush2.msra.mxu0 0.0
    %191 = vmatprep.subr.mxu0 0.0
    %192 = vmatpush2.msra.mxu0 0.0
    %193 = vmatprep.subr.mxu0 0.0
    %194 = vmatpush2.msra.mxu0 0.0
    %195 = vmatprep.subr.mxu0 0.0
    %196 = vmatpush2.msra.mxu0 0.0
    %197 = vmatprep.subr.mxu0 0.0
    %198 = vmatpush2.msra.mxu0 0.0
    %199 = vmatprep.subr.mxu0 0.0
    %200 = vmatpush2.msra.mxu0 0.0
    %201 = vmatprep.subr.mxu0 0.0
    %202 = vmatpush2.msra.mxu0 0.0
    %203 = vmatprep.subr.mxu0 0.0
    %204 = vmatpush2.msra.mxu0 0.0
    %205 = vmatprep.subr.mxu0 0.0
    %206 = vmatpush2.msra.mxu0 0.0
    %207 = vmatprep.subr.mxu0 0.0
    %208 = vmatpush2.msra.mxu0 0.0
    %209 = vmatprep.subr.mxu0 0.0
    %210 = vmatpush2.msra.mxu0 0.0
    %211 = vmatprep.subr.mxu0 0.0
    %212 = vmatpush2.msra.mxu0 0.0
    %213 = vmatprep.subr.mxu0 0.0
    %214 = vmatpush2.msra.mxu0 0.0
    %215 = vmatprep.mubr.f32.mxu0 0.0
    %216 = vmatmul.mubr.f32.gmra.mxu0 %v127
    %v217 = vpop.f32.mrf.mxu0
    %v218 = vadd.f32 %v149, %v217
    %v219 = vpop.f32.mrf.mxu0
    %220 = vdwg.mxu0
    %v221 = vmul.f32 %v218, 0.5
    %v222 = vmul.f32 %v218, 0.70710677
    %v223 = verf.f32.pop %v222
    %v224 = vadd.f32 %v223, 1.0
    %v225 = vmul.f32 %v221, %v224
    %v226 = vld [vmem:[%s5] sm:$0xff]
    %v227 = vld [vmem:[%s5 + $0x8] sm:$0xff]
    %v228 = vld [vmem:[%s5 + $0x10] sm:$0xff]
    %v229 = vld [vmem:[%s5 + $0x18] sm:$0xff]
    %v230 = vld [vmem:[%s5 + $0x20] sm:$0xff]
    %v231 = vld [vmem:[%s5 + $0x28] sm:$0xff]
    %v232 = vld [vmem:[%s5 + $0x30] sm:$0xff]
    %v233 = vld [vmem:[%s5 + $0x38] sm:$0xff]
    %v234 = vld [vmem:[%s5 + $0x40] sm:$0xff]
    %v235 = vld [vmem:[%s5 + $0x48] sm:$0xff]
    %v236 = vld [vmem:[%s5 + $0x50] sm:$0xff]
    %v237 = vld [vmem:[%s5 + $0x58] sm:$0xff]
    %v238 = vld [vmem:[%s5 + $0x60] sm:$0xff]
    %v239 = vld [vmem:[%s5 + $0x68] sm:$0xff]
    %v240 = vld [vmem:[%s5 + $0x70] sm:$0xff]
    %v241 = vld [vmem:[%s5 + $0x78] sm:$0xff]
    %v242 = vld [vmem:[%s6] sm:$0x1]
    %v244 = vlaneseq
    %v245 = vshrl.u32 %v244, 7
    %v246 = vsub.s32 0, %v245
    %v247 = vrot.slane %v242, %v246
    %249 = vmatprep.subr.mxu0 0.0
    %250 = vmatpush1.msra.mxu0 %v241
    %251 = vmatprep.subr.mxu0 0.0
    %252 = vmatpush1.msra.mxu0 %v240
    %253 = vmatprep.subr.mxu0 0.0
    %254 = vmatpush1.msra.mxu0 %v239
    %255 = vmatprep.subr.mxu0 0.0
    %256 = vmatpush1.msra.mxu0 %v238
    %257 = vmatprep.subr.mxu0 0.0
    %258 = vmatpush1.msra.mxu0 %v237
    %259 = vmatprep.subr.mxu0 0.0
    %260 = vmatpush1.msra.mxu0 %v236
    %261 = vmatprep.subr.mxu0 0.0
    %262 = vmatpush1.msra.mxu0 %v235
    %263 = vmatprep.subr.mxu0 0.0
    %264 = vmatpush1.msra.mxu0 %v234
    %265 = vmatprep.subr.mxu0 0.0
    %266 = vmatpush1.msra.mxu0 %v233
    %267 = vmatprep.subr.mxu0 0.0
    %268 = vmatpush1.msra.mxu0 %v232
    %269 = vmatprep.subr.mxu0 0.0
    %270 = vmatpush1.msra.mxu0 %v231
    %271 = vmatprep.subr.mxu0 0.0
    %272 = vmatpush1.msra.mxu0 %v230
    %273 = vmatprep.subr.mxu0 0.0
    %274 = vmatpush1.msra.mxu0 %v229
    %275 = vmatprep.subr.mxu0 0.0
    %276 = vmatpush1.msra.mxu0 %v228
    %277 = vmatprep.subr.mxu0 0.0
    %278 = vmatpush1.msra.mxu0 %v227
    %279 = vmatprep.subr.mxu0 0.0
    %280 = vmatpush1.msra.mxu0 %v226
    %281 = vmatprep.subr.mxu0 0.0
    %282 = vmatpush2.msra.mxu0 0.0
    %283 = vmatprep.subr.mxu0 0.0
    %284 = vmatpush2.msra.mxu0 0.0
    %285 = vmatprep.subr.mxu0 0.0
    %286 = vmatpush2.msra.mxu0 0.0
    %287 = vmatprep.subr.mxu0 0.0
    %288 = vmatpush2.msra.mxu0 0.0
    %289 = vmatprep.subr.mxu0 0.0
    %290 = vmatpush2.msra.mxu0 0.0
    %291 = vmatprep.subr.mxu0 0.0
    %292 = vmatpush2.msra.mxu0 0.0
    %293 = vmatprep.subr.mxu0 0.0
    %294 = vmatpush2.msra.mxu0 0.0
    %295 = vmatprep.subr.mxu0 0.0
    %296 = vmatpush2.msra.mxu0 0.0
    %297 = vmatprep.subr.mxu0 0.0
    %298 = vmatpush2.msra.mxu0 0.0
    %299 = vmatprep.subr.mxu0 0.0
    %300 = vmatpush2.msra.mxu0 0.0
    %301 = vmatprep.subr.mxu0 0.0
    %302 = vmatpush2.msra.mxu0 0.0
    %303 = vmatprep.subr.mxu0 0.0
    %304 = vmatpush2.msra.mxu0 0.0
    %305 = vmatprep.subr.mxu0 0.0
    %306 = vmatpush2.msra.mxu0 0.0
    %307 = vmatprep.subr.mxu0 0.0
    %308 = vmatpush2.msra.mxu0 0.0
    %309 = vmatprep.subr.mxu0 0.0
    %310 = vmatpush2.msra.mxu0 0.0
    %311 = vmatprep.subr.mxu0 0.0
    %312 = vmatpush2.msra.mxu0 0.0
    %313 = vmatprep.mubr.f32.mxu0 0.0
    %314 = vmatmul.mubr.f32.gmra.mxu0 %v225
    %v315 = vpop.f32.mrf.mxu0
    %v316 = vadd.f32 %v247, %v315
    %v317 = vpop.f32.mrf.mxu0
    %318 = vdwg.mxu0
    %319 = vst.msk [vmem:[#allocation5] sm:$0xff] %vm49, %v316
    // Predicated region
    $region34: #{tpu_custom_call.1} parent=1 // pred_check
      _
    $region35: #{tpu_custom_call.1} parent=1 // pred_check_branch
      %321 = sbr.rel (0) target = $region37
    $region36: #{tpu_custom_call.1} parent=1 // pred_region
      %s323 = ssub.s32 128, 128
      %324 = vsyncadd [#allocation4], %s323
      %s326 = sshll.u32 [#allocation5], 4
      %s327 = int_to_ptr.vmem [resolvable:$true] %s326
      %329 = dma.vmem_to_hbm [thread:$0]  %s327, 128, %s7, [#allocation4]
    $region37: #{tpu_custom_call.1} parent=1 // pred_fallthru
      _
    // Predicated region
    $region38: #{tpu_custom_call.1} parent=1 // pred_check
      _
    $region39: #{tpu_custom_call.1} parent=1 // pred_check_branch
      %331 = sbr.rel (0) target = $region41
    $region40: #{tpu_custom_call.1} parent=1 // pred_region
      %332 = dma.done [#allocation4], 128
    $region41: #{tpu_custom_call.1} parent=1 // pred_fallthru
      _
    %333 = vsyncpa [#allocation3], 1
    %334 = vsyncpa [#allocation4], 1

</llo_original>
